<compile_context>
chip_gen: v5e
topology: v5e:2x2
jax: 0.10.0
libtpu: 0.0.40
codegen_flags: <defaults>
</compile_context>

<pallas_src>
import functools

import jax
import jax.numpy as jnp
from jax.experimental import pallas as pl
from jax.experimental.pallas import tpu as pltpu

F = 128          # padded feature width (one lane tile) -- all layer widths <= 128
N_LAYERS = 5     # 4 hidden Linear+ReLU layers + 1 output Linear


def qnetwork_kernel(x_ref, w_ref, b_ref, out_ref, xpad_ref):
    """Fused MLP forward on one batch tile: 4x (Linear + ReLU) + final Linear.

    x_ref:    [TB, in_f]       native (9-wide) activations for this batch tile
    w_ref:    [5, 128, 128]    padded, pre-transposed weights ([in, out] layout)
    b_ref:    [5, 1, 128]      padded biases
    out_ref:  [TB, 128]        padded Q-values (cols >= 9 are exactly zero)
    xpad_ref: [TB, 128]        VMEM scratch: lane-dense zero-extended input
    """
    in_f = x_ref.shape[-1]
    # Zero-extend the native input tile to a lane-dense 128-wide tile.
    # Unconditional memset each step (do NOT rely on scratch persistence with
    # a pl.when(step==0) guard: under megacore each core owns its own scratch
    # and only sees a subset of grid steps). One extra VMEM pass is negligible.
    xpad_ref[...] = jnp.zeros_like(xpad_ref)
    xpad_ref[:, :in_f] = x_ref[...]

    h = xpad_ref[...]
    for i in range(N_LAYERS - 1):                      # static unroll: 4 hidden layers
        h = jnp.dot(h, w_ref[i], preferred_element_type=jnp.float32) + b_ref[i]
        h = jnp.maximum(h, 0.0)
    y = jnp.dot(h, w_ref[N_LAYERS - 1],
                preferred_element_type=jnp.float32) + b_ref[N_LAYERS - 1]
    out_ref[...] = y.astype(out_ref.dtype)


# ----------------------------------------------------------------------------
# Parameter init (matches the PyTorch module) and one-time packing to kernel
# layout.  This is layout plumbing done ONCE, outside the per-call jitted path.
# ----------------------------------------------------------------------------
def xavier_uniform(key, fan_out, fan_in, dtype=jnp.float32):
    """Matches torch.nn.init.xavier_uniform_ on a (fan_out, fan_in) weight."""
    limit = jnp.sqrt(6.0 / (fan_in + fan_out))
    return jax.random.uniform(key, (fan_out, fan_in), dtype,
                              minval=-limit, maxval=limit)


def linear_bias(key, fan_in, fan_out, dtype=jnp.float32):
    """Matches torch.nn.Linear default bias init: U(-1/sqrt(fan_in), 1/sqrt(fan_in))."""
    bound = 1.0 / jnp.sqrt(jnp.asarray(fan_in, dtype))
    return jax.random.uniform(key, (fan_out,), dtype, minval=-bound, maxval=bound)


def init_qnetwork_params(key, input_size, output_size, hidden_layers_size):
    sizes = [input_size] + list(hidden_layers_size) + [output_size]
    params = []
    for i in range(len(sizes) - 1):
        key, kw, kb = jax.random.split(key, 3)
        w = xavier_uniform(kw, sizes[i + 1], sizes[i])   # (out, in), torch layout
        b = linear_bias(kb, sizes[i], sizes[i + 1])      # (out,)
        params.append((w, b))
    return params


def pack_qnetwork_params(params, dtype=jnp.float32):
    """Transpose each torch-layout (out,in) weight to (in,out), zero-pad to
    (128,128), and stack; same for biases padded to 128 lanes.
    (On v6e/v7x, dtype=jnp.bfloat16 halves resident VMEM + DMA; keep f32 for a
    single code path that also runs on v5e.)"""
    assert len(params) == N_LAYERS
    w_stack = jnp.zeros((N_LAYERS, F, F), dtype)
    b_stack = jnp.zeros((N_LAYERS, 1, F), dtype)
    for i, (w, b) in enumerate(params):
        out_f, in_f = w.shape
        w_stack = w_stack.at[i, :in_f, :out_f].set(jnp.transpose(w).astype(dtype))
        b_stack = b_stack.at[i, 0, :out_f].set(b.astype(dtype))
    return w_stack, b_stack


# ----------------------------------------------------------------------------
# Forward pass
# ----------------------------------------------------------------------------
def _round_up(n, m):
    return pl.cdiv(n, m) * m


@functools.partial(jax.jit,
                   static_argnames=("output_size", "block_batch", "return_padded"))
def qnetwork_forward(x, w_stack, b_stack, *, output_size=9, block_batch=512,
                     return_padded=False):
    """x: [batch, input_size]. Returns [batch, output_size] f32 Q-values
    (or the raw [padded_batch, 128] kernel output if return_padded=True)."""
    batch, in_f = x.shape
    x = x.astype(jnp.float32)

    # Balanced batch tiling: minimizes padding (batch=260 -> 2 tiles of 136,
    # not 512 rows).  Force >= 2 grid steps above 256 rows so v7x's two
    # TensorCores both get work; cap tb at 1024 (VMEM + pipeline sweet spot,
    # ~2 MiB total -- well under v5e's 16 MiB scoped-VMEM default).
    n_tiles = pl.cdiv(batch, block_batch)
    if batch > 256 and n_tiles < 2:
        n_tiles = 2
    tb = min(1024, _round_up(pl.cdiv(batch, n_tiles), 8))
    n_tiles = pl.cdiv(batch, tb)
    padded_batch = n_tiles * tb

    # Only remaining wrapper glue: a tiny (<= tb rows) row-pad of the 9-wide
    # input, and only when the batch doesn't already tile evenly.
    if padded_batch != batch:
        x = jnp.pad(x, ((0, padded_batch - batch), (0, 0)))

    out_padded = pl.pallas_call(
        qnetwork_kernel,
        out_shape=jax.ShapeDtypeStruct((padded_batch, F), jnp.float32),
        grid=(n_tiles,),
        in_specs=[
            # Native-width x tile: last dim (9) == full array dim, so the
            # (8,128) tiling rule is satisfied without lane padding in HBM.
            pl.BlockSpec((tb, in_f), lambda i: (i, 0)),
            # Constant index_maps -> weights/biases stay VMEM-resident across
            # all grid steps (only ~320 KiB + 2.5 KiB).
            pl.BlockSpec((N_LAYERS, F, F), lambda i: (0, 0, 0)),
            pl.BlockSpec((N_LAYERS, 1, F), lambda i: (0, 0, 0)),
        ],
        out_specs=pl.BlockSpec((tb, F), lambda i: (i, 0)),   # lane-dense output
        scratch_shapes=[pltpu.VMEM((tb, F), jnp.float32)],   # zero-extended x tile
        compiler_params=pltpu.CompilerParams(
            dimension_semantics=("parallel",)),               # v7x: shard across 2 TCs
    )(x, w_stack, b_stack)

    if return_padded:
        return out_padded               # consumer slices / fuses argmax lazily
    return out_padded[:batch, :output_size]


def qnetwork_reference(x, params):
    """Pure-JAX reference matching the PyTorch forward."""
    h = x.astype(jnp.float32)
    n = len(params)
    for i, (w, b) in enumerate(params):
        h = jnp.dot(h, w.T, precision=jax.lax.Precision.HIGHEST) + b
        if i < n - 1:
            h = jnp.maximum(h, 0.0)
    return h


if __name__ == "__main__":
    INPUT_SIZE = 9                     # 9 board cells
    OUTPUT_SIZE = 9                    # 9 possible actions
    HIDDEN = (32, 32, 32, 32)
    BATCH = 8

    key = jax.random.PRNGKey(0)
    key_params, key_x, key_x2 = jax.random.split(key, 3)

    params = init_qnetwork_params(key_params, INPUT_SIZE, OUTPUT_SIZE, HIDDEN)
    w_stack, b_stack = pack_qnetwork_params(params)     # one-time kernel layout

    # Board states in {-1, 0, 1}, cast to float like the DQN would feed them.
    x = jax.random.randint(key_x, (BATCH, INPUT_SIZE), -1, 2).astype(jnp.float32)

    y = qnetwork_forward(x, w_stack, b_stack, output_size=OUTPUT_SIZE)
    y = jax.block_until_ready(y)
    y_ref = qnetwork_reference(x, params)
    assert y.shape == (BATCH, OUTPUT_SIZE)
    assert jnp.allclose(y, y_ref, atol=1e-3, rtol=1e-3), "mismatch vs JAX reference"

    # Replay-buffer-sized batch: exercises balanced multi-tile grid (2 x 136)
    # with row padding -- the regime where the kernel actually pays off.
    BIG_BATCH = 260
    xb = jax.random.randint(key_x2, (BIG_BATCH, INPUT_SIZE), -1, 2).astype(jnp.float32)
    yb = qnetwork_forward(xb, w_stack, b_stack, output_size=OUTPUT_SIZE)
    yb = jax.block_until_ready(yb)
    yb_ref = qnetwork_reference(xb, params)
    assert yb.shape == (BIG_BATCH, OUTPUT_SIZE)
    assert jnp.allclose(yb, yb_ref, atol=1e-3, rtol=1e-3), \
        "mismatch vs JAX reference (big batch)"

    print("KERNEL_OK")
</pallas_src>

<mosaic_0001>
module attributes {stable_mosaic.version = 11 : i64} {
  func.func @qnetwork_kernel(%arg0: i32, %arg1: memref<8x9xf32, #tpu.memory_space<vmem>>, %arg2: memref<5x128x128xf32, #tpu.memory_space<vmem>>, %arg3: memref<5x1x128xf32, #tpu.memory_space<vmem>>, %arg4: memref<8x128xf32, #tpu.memory_space<vmem>>, %arg5: memref<8x128xf32, #tpu.memory_space<vmem>>) attributes {dimension_semantics = [#tpu.dimension_semantics<parallel>], iteration_bounds = array<i64: 1>, scalar_prefetch = 0 : i64, scratch_operands = 1 : i64, tpu.core_type = #tpu.core_type<tc>, window_params = [{transform_indices = @transform_0, window_bounds = array<i64: 8, 9>}, {pipeline_mode = #tpu.pipeline_mode<synchronous>, transform_indices = @transform_1, window_bounds = array<i64: 5, 128, 128>}, {pipeline_mode = #tpu.pipeline_mode<synchronous>, transform_indices = @transform_2, window_bounds = array<i64: 5, 1, 128>}, {transform_indices = @transform_3, window_bounds = array<i64: 8, 128>}]} {
    %cst = arith.constant 0.000000e+00 : f32
    %0 = vector.broadcast %cst : f32 to vector<8x128xf32>
    %c0 = arith.constant 0 : index
    %c0_0 = arith.constant 0 : index
    %1 = vector.load %arg5[%c0, %c0_0] : memref<8x128xf32, #tpu.memory_space<vmem>>, vector<8x128xf32>
    tpu.vector_store %arg5[%c0, %c0_0], %0 {strides = array<i32>} : memref<8x128xf32, #tpu.memory_space<vmem>>, vector<8x128xf32>,
    %c0_1 = arith.constant 0 : index
    %c0_2 = arith.constant 0 : index
    %2 = vector.load %arg1[%c0_1, %c0_2] : memref<8x9xf32, #tpu.memory_space<vmem>>, vector<8x9xf32>
    %c0_3 = arith.constant 0 : index
    %c0_4 = arith.constant 0 : index
    %3 = vector.load %arg5[%c0_3, %c0_4] : memref<8x128xf32, #tpu.memory_space<vmem>>, vector<8x9xf32>
    tpu.vector_store %arg5[%c0_3, %c0_4], %2 {strides = array<i32>} : memref<8x128xf32, #tpu.memory_space<vmem>>, vector<8x9xf32>,
    %c0_5 = arith.constant 0 : index
    %c0_6 = arith.constant 0 : index
    %4 = vector.load %arg5[%c0_5, %c0_6] : memref<8x128xf32, #tpu.memory_space<vmem>>, vector<8x128xf32>
    %c0_7 = arith.constant 0 : index
    %c0_8 = arith.constant 0 : index
    %c0_9 = arith.constant 0 : index
    %5 = vector.load %arg2[%c0_7, %c0_8, %c0_9] : memref<5x128x128xf32, #tpu.memory_space<vmem>>, vector<1x128x128xf32>
    %6 = vector.shape_cast %5 : vector<1x128x128xf32> to vector<128x128xf32>
    %cst_10 = arith.constant dense<0.000000e+00> : vector<8x128xf32>
    %7 = tpu.matmul %4, %6, %cst_10 {dimension_numbers = #tpu.dot_dimension_numbers<[1], [0], [0], [1], [0, 0, 1, 1], [], []>} : vector<8x128xf32>, vector<128x128xf32>, vector<8x128xf32> -> vector<8x128xf32>
    %c0_11 = arith.constant 0 : index
    %c0_12 = arith.constant 0 : index
    %c0_13 = arith.constant 0 : index
    %8 = vector.load %arg3[%c0_11, %c0_12, %c0_13] : memref<5x1x128xf32, #tpu.memory_space<vmem>>, vector<1x1x128xf32>
    %9 = vector.shape_cast %8 : vector<1x1x128xf32> to vector<1x128xf32>
    %10 = vector.broadcast %9 : vector<1x128xf32> to vector<8x128xf32>
    %11 = arith.addf %7, %10 : vector<8x128xf32>
    %cst_14 = arith.constant 0.000000e+00 : f32
    %12 = vector.broadcast %cst_14 : f32 to vector<8x128xf32>
    %13 = arith.maximumf %11, %12 : vector<8x128xf32>
    %c1 = arith.constant 1 : index
    %c0_15 = arith.constant 0 : index
    %c0_16 = arith.constant 0 : index
    %14 = vector.load %arg2[%c1, %c0_15, %c0_16] : memref<5x128x128xf32, #tpu.memory_space<vmem>>, vector<1x128x128xf32>
    %15 = vector.shape_cast %14 : vector<1x128x128xf32> to vector<128x128xf32>
    %cst_17 = arith.constant dense<0.000000e+00> : vector<8x128xf32>
    %16 = tpu.matmul %13, %15, %cst_17 {dimension_numbers = #tpu.dot_dimension_numbers<[1], [0], [0], [1], [0, 0, 1, 1], [], []>} : vector<8x128xf32>, vector<128x128xf32>, vector<8x128xf32> -> vector<8x128xf32>
    %c1_18 = arith.constant 1 : index
    %c0_19 = arith.constant 0 : index
    %c0_20 = arith.constant 0 : index
    %17 = vector.load %arg3[%c1_18, %c0_19, %c0_20] : memref<5x1x128xf32, #tpu.memory_space<vmem>>, vector<1x1x128xf32>
    %18 = vector.shape_cast %17 : vector<1x1x128xf32> to vector<1x128xf32>
    %19 = vector.broadcast %18 : vector<1x128xf32> to vector<8x128xf32>
    %20 = arith.addf %16, %19 : vector<8x128xf32>
    %cst_21 = arith.constant 0.000000e+00 : f32
    %21 = vector.broadcast %cst_21 : f32 to vector<8x128xf32>
    %22 = arith.maximumf %20, %21 : vector<8x128xf32>
    %c2 = arith.constant 2 : index
    %c0_22 = arith.constant 0 : index
    %c0_23 = arith.constant 0 : index
    %23 = vector.load %arg2[%c2, %c0_22, %c0_23] : memref<5x128x128xf32, #tpu.memory_space<vmem>>, vector<1x128x128xf32>
    %24 = vector.shape_cast %23 : vector<1x128x128xf32> to vector<128x128xf32>
    %cst_24 = arith.constant dense<0.000000e+00> : vector<8x128xf32>
    %25 = tpu.matmul %22, %24, %cst_24 {dimension_numbers = #tpu.dot_dimension_numbers<[1], [0], [0], [1], [0, 0, 1, 1], [], []>} : vector<8x128xf32>, vector<128x128xf32>, vector<8x128xf32> -> vector<8x128xf32>
    %c2_25 = arith.constant 2 : index
    %c0_26 = arith.constant 0 : index
    %c0_27 = arith.constant 0 : index
    %26 = vector.load %arg3[%c2_25, %c0_26, %c0_27] : memref<5x1x128xf32, #tpu.memory_space<vmem>>, vector<1x1x128xf32>
    %27 = vector.shape_cast %26 : vector<1x1x128xf32> to vector<1x128xf32>
    %28 = vector.broadcast %27 : vector<1x128xf32> to vector<8x128xf32>
    %29 = arith.addf %25, %28 : vector<8x128xf32>
    %cst_28 = arith.constant 0.000000e+00 : f32
    %30 = vector.broadcast %cst_28 : f32 to vector<8x128xf32>
    %31 = arith.maximumf %29, %30 : vector<8x128xf32>
    %c3 = arith.constant 3 : index
    %c0_29 = arith.constant 0 : index
    %c0_30 = arith.constant 0 : index
    %32 = vector.load %arg2[%c3, %c0_29, %c0_30] : memref<5x128x128xf32, #tpu.memory_space<vmem>>, vector<1x128x128xf32>
    %33 = vector.shape_cast %32 : vector<1x128x128xf32> to vector<128x128xf32>
    %cst_31 = arith.constant dense<0.000000e+00> : vector<8x128xf32>
    %34 = tpu.matmul %31, %33, %cst_31 {dimension_numbers = #tpu.dot_dimension_numbers<[1], [0], [0], [1], [0, 0, 1, 1], [], []>} : vector<8x128xf32>, vector<128x128xf32>, vector<8x128xf32> -> vector<8x128xf32>
    %c3_32 = arith.constant 3 : index
    %c0_33 = arith.constant 0 : index
    %c0_34 = arith.constant 0 : index
    %35 = vector.load %arg3[%c3_32, %c0_33, %c0_34] : memref<5x1x128xf32, #tpu.memory_space<vmem>>, vector<1x1x128xf32>
    %36 = vector.shape_cast %35 : vector<1x1x128xf32> to vector<1x128xf32>
    %37 = vector.broadcast %36 : vector<1x128xf32> to vector<8x128xf32>
    %38 = arith.addf %34, %37 : vector<8x128xf32>
    %cst_35 = arith.constant 0.000000e+00 : f32
    %39 = vector.broadcast %cst_35 : f32 to vector<8x128xf32>
    %40 = arith.maximumf %38, %39 : vector<8x128xf32>
    %c4 = arith.constant 4 : index
    %c0_36 = arith.constant 0 : index
    %c0_37 = arith.constant 0 : index
    %41 = vector.load %arg2[%c4, %c0_36, %c0_37] : memref<5x128x128xf32, #tpu.memory_space<vmem>>, vector<1x128x128xf32>
    %42 = vector.shape_cast %41 : vector<1x128x128xf32> to vector<128x128xf32>
    %cst_38 = arith.constant dense<0.000000e+00> : vector<8x128xf32>
    %43 = tpu.matmul %40, %42, %cst_38 {dimension_numbers = #tpu.dot_dimension_numbers<[1], [0], [0], [1], [0, 0, 1, 1], [], []>} : vector<8x128xf32>, vector<128x128xf32>, vector<8x128xf32> -> vector<8x128xf32>
    %c4_39 = arith.constant 4 : index
    %c0_40 = arith.constant 0 : index
    %c0_41 = arith.constant 0 : index
    %44 = vector.load %arg3[%c4_39, %c0_40, %c0_41] : memref<5x1x128xf32, #tpu.memory_space<vmem>>, vector<1x1x128xf32>
    %45 = vector.shape_cast %44 : vector<1x1x128xf32> to vector<1x128xf32>
    %46 = vector.broadcast %45 : vector<1x128xf32> to vector<8x128xf32>
    %47 = arith.addf %43, %46 : vector<8x128xf32>
    %c0_42 = arith.constant 0 : index
    %c0_43 = arith.constant 0 : index
    %48 = vector.load %arg4[%c0_42, %c0_43] : memref<8x128xf32, #tpu.memory_space<vmem>>, vector<8x128xf32>
    tpu.vector_store %arg4[%c0_42, %c0_43], %47 {strides = array<i32>} : memref<8x128xf32, #tpu.memory_space<vmem>>, vector<8x128xf32>,
    return
  }
  func.func @transform_0(%arg0: i32) -> (i32, i32) {
    %c0_i32 = arith.constant 0 : i32
    %c0_i32_0 = arith.constant 0 : i32
    return %arg0, %c0_i32 : i32, i32
  }
  func.func @transform_1(%arg0: i32) -> (i32, i32, i32) {
    %c0_i32 = arith.constant 0 : i32
    %c0_i32_0 = arith.constant 0 : i32
    %c0_i32_1 = arith.constant 0 : i32
    %c0_i32_2 = arith.constant 0 : i32
    return %c0_i32, %c0_i32_0, %c0_i32_1 : i32, i32, i32
  }
  func.func @transform_2(%arg0: i32) -> (i32, i32, i32) {
    %c0_i32 = arith.constant 0 : i32
    %c0_i32_0 = arith.constant 0 : i32
    %c0_i32_1 = arith.constant 0 : i32
    %c0_i32_2 = arith.constant 0 : i32
    return %c0_i32, %c0_i32_0, %c0_i32_1 : i32, i32, i32
  }
  func.func @transform_3(%arg0: i32) -> (i32, i32) {
    %c0_i32 = arith.constant 0 : i32
    %c0_i32_0 = arith.constant 0 : i32
    return %arg0, %c0_i32 : i32, i32
  }
}

</mosaic_0001>

<llo_original>
// kernel: qnetwork_forward.1
$region0: #{qnetwork_forward.1}
  #allocation0 [shape = 'u32[]', space=smem, size = 0x4, offset = 0x4, fixed_abs, tag = 'smem constant byte address 0x4 - core index']
  #allocation1 [shape = 'u32[72,128]{1,0:T(1,128)}', space=vmem, size = 0x9000, scoped, tag = 'internal scratch']
  #allocation2 [shape = 'f32[8,128]{1,0:T(8,128)}', space=vmem, size = 0x1000, scoped, tag = 'scratch operand']
  %s0 = inlined_call_operand.hbm [shape: f32[8,9], index: 0, kind: input, shape index: {}]
  %s1 = inlined_call_operand.hbm [shape: f32[5,128,128], index: 1, kind: input, shape index: {}]
  %s2 = inlined_call_operand.hbm [shape: f32[5,1,128], index: 2, kind: input, shape index: {}]
  %s3 = inlined_call_operand.hbm [shape: f32[8,128], index: 3, kind: output, shape index: {}]
  %s4 = sld [smem:[#allocation0]]
  $region34: #{qnetwork_forward.1} parent=0
    _
  %s6 = ssub.s32 1, %s4
  %s7 = scalar_select 0, %s6, %s4
  $region1: #{qnetwork_forward.1} parent=0
    #allocation3 [shape = 'u8[4096]{0}', space=vmem, size = 0x1000, scoped, tag = 'input window, operand 0, single buffered']
    #allocation4 [shape = 's32[1]{0}', space=sflag, size = 0x4, scoped, tag = 'scoped memory for qnetwork_forward.1']
    #allocation5 [shape = 's32[1]{0}', space=sflag, size = 0x4, scoped, tag = 'scoped memory for qnetwork_forward.1']
    #allocation6 [shape = 'u8[327680]{0}', space=vmem, size = 0x50000, scoped, tag = 'input window, operand 1, single buffered']
    #allocation7 [shape = 's32[1]{0}', space=sflag, size = 0x4, scoped, tag = 'scoped memory for qnetwork_forward.1']
    #allocation8 [shape = 'u8[2560]{0}', space=vmem, size = 0xc00, scoped, tag = 'input window, operand 2, single buffered']
    #allocation9 [shape = 'u8[4096]{0}', space=vmem, size = 0x1000, scoped, tag = 'output window, operand 0, single buffered']
    %8 = vsyncpa [#allocation4], 0
    %9 = vsyncpa [#allocation7], 0
    %10 = vsyncpa [#allocation5], 0
    // Predicated region
    $region2: #{qnetwork_forward.1} parent=1 // pred_check
      _
    $region3: #{qnetwork_forward.1} parent=1 // pred_check_branch
      %12 = sbr.rel (0) target = $region5
    $region4: #{qnetwork_forward.1} parent=1 // pred_region
      %14 = vsyncadd [#allocation4], 0
      %s16 = sshll.u32 %s0, 4
      %s17 = int_to_ptr.hbm [resolvable:$true] %s16
      %s18 = sshll.u32 [#allocation3], 4
      %s19 = int_to_ptr.vmem [resolvable:$true] %s18
      %21 = dma.hbm_to_vmem [thread:$0]  %s17, 128, %s19, [#allocation4]
    $region5: #{qnetwork_forward.1} parent=1 // pred_fallthru
      _
    // Predicated region
    $region6: #{qnetwork_forward.1} parent=1 // pred_check
      _
    $region7: #{qnetwork_forward.1} parent=1 // pred_check_branch
      %23 = sbr.rel (0) target = $region9
    $region8: #{qnetwork_forward.1} parent=1 // pred_region
      %25 = vsyncadd [#allocation7], 0
      %s26 = sshll.u32 %s1, 4
      %s27 = int_to_ptr.hbm [resolvable:$true] %s26
      %s28 = sshll.u32 [#allocation6], 4
      %s29 = int_to_ptr.vmem [resolvable:$true] %s28
      %34 = dma.hbm_to_vmem [thread:$0]  %s27, 10240, %s29, [#allocation7], 128, 128, 8
    $region9: #{qnetwork_forward.1} parent=1 // pred_fallthru
      _
    // Predicated region
    $region10: #{qnetwork_forward.1} parent=1 // pred_check
      _
    $region11: #{qnetwork_forward.1} parent=1 // pred_check_branch
      %36 = sbr.rel (0) target = $region13
    $region12: #{qnetwork_forward.1} parent=1 // pred_region
      %38 = vsyncadd [#allocation7], 0
      %s39 = sshll.u32 %s2, 4
      %s40 = int_to_ptr.hbm [resolvable:$true] %s39
      %s41 = sshll.u32 [#allocation8], 4
      %s42 = int_to_ptr.vmem [resolvable:$true] %s41
      %47 = dma.hbm_to_vmem [thread:$0]  %s40, 80, %s42, [#allocation7], 16, 16, 1
    $region13: #{qnetwork_forward.1} parent=1 // pred_fallthru
      _
    // Predicated region
    $region14: #{qnetwork_forward.1} parent=1 // pred_check
      _
    $region15: #{qnetwork_forward.1} parent=1 // pred_check_branch
      %49 = sbr.rel (0) target = $region17
    $region16: #{qnetwork_forward.1} parent=1 // pred_region
      %51 = dma.done [#allocation4], 128
    $region17: #{qnetwork_forward.1} parent=1 // pred_fallthru
      _
    // Predicated region
    $region18: #{qnetwork_forward.1} parent=1 // pred_check
      _
    $region19: #{qnetwork_forward.1} parent=1 // pred_check_branch
      %53 = sbr.rel (0) target = $region21
    $region20: #{qnetwork_forward.1} parent=1 // pred_region
      %55 = dma.done [#allocation7], 10240
    $region21: #{qnetwork_forward.1} parent=1 // pred_fallthru
      _
    // Predicated region
    $region22: #{qnetwork_forward.1} parent=1 // pred_check
      _
    $region23: #{qnetwork_forward.1} parent=1 // pred_check_branch
      %57 = sbr.rel (0) target = $region25
    $region24: #{qnetwork_forward.1} parent=1 // pred_region
      %59 = dma.done [#allocation7], 80
    $region25: #{qnetwork_forward.1} parent=1 // pred_fallthru
      _
    %60 = vst [vmem:[#allocation2] sm:$0xff] 0.0
    %v61 = vld [vmem:[#allocation3] sm:$0xff]
    %vm62 = vcmask 72704
    %63 = vst.msk [vmem:[#allocation2] sm:$0xff] %vm62, %v61
    %v64 = vld [vmem:[#allocation2] sm:$0xff]
    %v65 = vld [vmem:[#allocation6] sm:$0xff]
    %v66 = vld [vmem:[#allocation6 + $0x8] sm:$0xff]
    %v67 = vld [vmem:[#allocation6 + $0x10] sm:$0xff]
    %v68 = vld [vmem:[#allocation6 + $0x18] sm:$0xff]
    %v69 = vld [vmem:[#allocation6 + $0x20] sm:$0xff]
    %v70 = vld [vmem:[#allocation6 + $0x28] sm:$0xff]
    %v71 = vld [vmem:[#allocation6 + $0x30] sm:$0xff]
    %v72 = vld [vmem:[#allocation6 + $0x38] sm:$0xff]
    %v73 = vld [vmem:[#allocation6 + $0x40] sm:$0xff]
    %v74 = vld [vmem:[#allocation6 + $0x48] sm:$0xff]
    %v75 = vld [vmem:[#allocation6 + $0x50] sm:$0xff]
    %v76 = vld [vmem:[#allocation6 + $0x58] sm:$0xff]
    %v77 = vld [vmem:[#allocation6 + $0x60] sm:$0xff]
    %v78 = vld [vmem:[#allocation6 + $0x68] sm:$0xff]
    %v79 = vld [vmem:[#allocation6 + $0x70] sm:$0xff]
    %v80 = vld [vmem:[#allocation6 + $0x78] sm:$0xff]
    %v81 = vld [vmem:[#allocation8] sm:$0x1]
    %v83 = vperm.slane %v81, 0
    %85 = vmatpush.msra.mxu0 %v80
    %86 = vmatpush.msra.mxu0 %v79
    %87 = vmatpush.msra.mxu0 %v78
    %88 = vmatpush.msra.mxu0 %v77
    %89 = vmatpush.msra.mxu0 %v76
    %90 = vmatpush.msra.mxu0 %v75
    %91 = vmatpush.msra.mxu0 %v74
    %92 = vmatpush.msra.mxu0 %v73
    %93 = vmatpush.msra.mxu0 %v72
    %94 = vmatpush.msra.mxu0 %v71
    %95 = vmatpush.msra.mxu0 %v70
    %96 = vmatpush.msra.mxu0 %v69
    %97 = vmatpush.msra.mxu0 %v68
    %98 = vmatpush.msra.mxu0 %v67
    %99 = vmatpush.msra.mxu0 %v66
    %100 = vmatpush.msra.mxu0 %v65
    %101 = vmatmul.f32.gmra.mxu0 %v64
    %v102 = vpop.f32.mrf.mxu0
    %v103 = vadd.f32 %v83, %v102
    %104 = vdwg.mxu0
    %v105 = vmax.f32 %v103, 0.0
    %s106 = scalar_lea.vmem [#allocation6], 128
    %v107 = vld [vmem:[%s106] sm:$0xff]
    %v108 = vld [vmem:[%s106 + $0x8] sm:$0xff]
    %v109 = vld [vmem:[%s106 + $0x10] sm:$0xff]
    %v110 = vld [vmem:[%s106 + $0x18] sm:$0xff]
    %v111 = vld [vmem:[%s106 + $0x20] sm:$0xff]
    %v112 = vld [vmem:[%s106 + $0x28] sm:$0xff]
    %v113 = vld [vmem:[%s106 + $0x30] sm:$0xff]
    %v114 = vld [vmem:[%s106 + $0x38] sm:$0xff]
    %v115 = vld [vmem:[%s106 + $0x40] sm:$0xff]
    %v116 = vld [vmem:[%s106 + $0x48] sm:$0xff]
    %v117 = vld [vmem:[%s106 + $0x50] sm:$0xff]
    %v118 = vld [vmem:[%s106 + $0x58] sm:$0xff]
    %v119 = vld [vmem:[%s106 + $0x60] sm:$0xff]
    %v120 = vld [vmem:[%s106 + $0x68] sm:$0xff]
    %v121 = vld [vmem:[%s106 + $0x70] sm:$0xff]
    %v122 = vld [vmem:[%s106 + $0x78] sm:$0xff]
    %s123 = scalar_lea.vmem [#allocation8], 1
    %v124 = vld [vmem:[%s123] sm:$0x1]
    %v126 = vperm.slane %v124, 0
    %128 = vmatpush.msra.mxu0 %v122
    %129 = vmatpush.msra.mxu0 %v121
    %130 = vmatpush.msra.mxu0 %v120
    %131 = vmatpush.msra.mxu0 %v119
    %132 = vmatpush.msra.mxu0 %v118
    %133 = vmatpush.msra.mxu0 %v117
    %134 = vmatpush.msra.mxu0 %v116
    %135 = vmatpush.msra.mxu0 %v115
    %136 = vmatpush.msra.mxu0 %v114
    %137 = vmatpush.msra.mxu0 %v113
    %138 = vmatpush.msra.mxu0 %v112
    %139 = vmatpush.msra.mxu0 %v111
    %140 = vmatpush.msra.mxu0 %v110
    %141 = vmatpush.msra.mxu0 %v109
    %142 = vmatpush.msra.mxu0 %v108
    %143 = vmatpush.msra.mxu0 %v107
    %144 = vmatmul.f32.gmra.mxu0 %v105
    %v145 = vpop.f32.mrf.mxu0
    %v146 = vadd.f32 %v126, %v145
    %147 = vdwg.mxu0
    %v148 = vmax.f32 %v146, 0.0
    %s149 = scalar_lea.vmem [#allocation6], 256
    %v150 = vld [vmem:[%s149] sm:$0xff]
    %v151 = vld [vmem:[%s149 + $0x8] sm:$0xff]
    %v152 = vld [vmem:[%s149 + $0x10] sm:$0xff]
    %v153 = vld [vmem:[%s149 + $0x18] sm:$0xff]
    %v154 = vld [vmem:[%s149 + $0x20] sm:$0xff]
    %v155 = vld [vmem:[%s149 + $0x28] sm:$0xff]
    %v156 = vld [vmem:[%s149 + $0x30] sm:$0xff]
    %v157 = vld [vmem:[%s149 + $0x38] sm:$0xff]
    %v158 = vld [vmem:[%s149 + $0x40] sm:$0xff]
    %v159 = vld [vmem:[%s149 + $0x48] sm:$0xff]
    %v160 = vld [vmem:[%s149 + $0x50] sm:$0xff]
    %v161 = vld [vmem:[%s149 + $0x58] sm:$0xff]
    %v162 = vld [vmem:[%s149 + $0x60] sm:$0xff]
    %v163 = vld [vmem:[%s149 + $0x68] sm:$0xff]
    %v164 = vld [vmem:[%s149 + $0x70] sm:$0xff]
    %v165 = vld [vmem:[%s149 + $0x78] sm:$0xff]
    %s166 = scalar_lea.vmem [#allocation8], 2
    %v167 = vld [vmem:[%s166] sm:$0x1]
    %v169 = vperm.slane %v167, 0
    %171 = vmatpush.msra.mxu0 %v165
    %172 = vmatpush.msra.mxu0 %v164
    %173 = vmatpush.msra.mxu0 %v163
    %174 = vmatpush.msra.mxu0 %v162
    %175 = vmatpush.msra.mxu0 %v161
    %176 = vmatpush.msra.mxu0 %v160
    %177 = vmatpush.msra.mxu0 %v159
    %178 = vmatpush.msra.mxu0 %v158
    %179 = vmatpush.msra.mxu0 %v157
    %180 = vmatpush.msra.mxu0 %v156
    %181 = vmatpush.msra.mxu0 %v155
    %182 = vmatpush.msra.mxu0 %v154
    %183 = vmatpush.msra.mxu0 %v153
    %184 = vmatpush.msra.mxu0 %v152
    %185 = vmatpush.msra.mxu0 %v151
    %186 = vmatpush.msra.mxu0 %v150
    %187 = vmatmul.f32.gmra.mxu0 %v148
    %v188 = vpop.f32.mrf.mxu0
    %v189 = vadd.f32 %v169, %v188
    %190 = vdwg.mxu0
    %v191 = vmax.f32 %v189, 0.0
    %s192 = scalar_lea.vmem [#allocation6], 384
    %v193 = vld [vmem:[%s192] sm:$0xff]
    %v194 = vld [vmem:[%s192 + $0x8] sm:$0xff]
    %v195 = vld [vmem:[%s192 + $0x10] sm:$0xff]
    %v196 = vld [vmem:[%s192 + $0x18] sm:$0xff]
    %v197 = vld [vmem:[%s192 + $0x20] sm:$0xff]
    %v198 = vld [vmem:[%s192 + $0x28] sm:$0xff]
    %v199 = vld [vmem:[%s192 + $0x30] sm:$0xff]
    %v200 = vld [vmem:[%s192 + $0x38] sm:$0xff]
    %v201 = vld [vmem:[%s192 + $0x40] sm:$0xff]
    %v202 = vld [vmem:[%s192 + $0x48] sm:$0xff]
    %v203 = vld [vmem:[%s192 + $0x50] sm:$0xff]
    %v204 = vld [vmem:[%s192 + $0x58] sm:$0xff]
    %v205 = vld [vmem:[%s192 + $0x60] sm:$0xff]
    %v206 = vld [vmem:[%s192 + $0x68] sm:$0xff]
    %v207 = vld [vmem:[%s192 + $0x70] sm:$0xff]
    %v208 = vld [vmem:[%s192 + $0x78] sm:$0xff]
    %s209 = scalar_lea.vmem [#allocation8], 3
    %v210 = vld [vmem:[%s209] sm:$0x1]
    %v212 = vperm.slane %v210, 0
    %214 = vmatpush.msra.mxu0 %v208
    %215 = vmatpush.msra.mxu0 %v207
    %216 = vmatpush.msra.mxu0 %v206
    %217 = vmatpush.msra.mxu0 %v205
    %218 = vmatpush.msra.mxu0 %v204
    %219 = vmatpush.msra.mxu0 %v203
    %220 = vmatpush.msra.mxu0 %v202
    %221 = vmatpush.msra.mxu0 %v201
    %222 = vmatpush.msra.mxu0 %v200
    %223 = vmatpush.msra.mxu0 %v199
    %224 = vmatpush.msra.mxu0 %v198
    %225 = vmatpush.msra.mxu0 %v197
    %226 = vmatpush.msra.mxu0 %v196
    %227 = vmatpush.msra.mxu0 %v195
    %228 = vmatpush.msra.mxu0 %v194
    %229 = vmatpush.msra.mxu0 %v193
    %230 = vmatmul.f32.gmra.mxu0 %v191
    %v231 = vpop.f32.mrf.mxu0
    %v232 = vadd.f32 %v212, %v231
    %233 = vdwg.mxu0
    %v234 = vmax.f32 %v232, 0.0
    %s235 = scalar_lea.vmem [#allocation6], 512
    %v236 = vld [vmem:[%s235] sm:$0xff]
    %v237 = vld [vmem:[%s235 + $0x8] sm:$0xff]
    %v238 = vld [vmem:[%s235 + $0x10] sm:$0xff]
    %v239 = vld [vmem:[%s235 + $0x18] sm:$0xff]
    %v240 = vld [vmem:[%s235 + $0x20] sm:$0xff]
    %v241 = vld [vmem:[%s235 + $0x28] sm:$0xff]
    %v242 = vld [vmem:[%s235 + $0x30] sm:$0xff]
    %v243 = vld [vmem:[%s235 + $0x38] sm:$0xff]
    %v244 = vld [vmem:[%s235 + $0x40] sm:$0xff]
    %v245 = vld [vmem:[%s235 + $0x48] sm:$0xff]
    %v246 = vld [vmem:[%s235 + $0x50] sm:$0xff]
    %v247 = vld [vmem:[%s235 + $0x58] sm:$0xff]
    %v248 = vld [vmem:[%s235 + $0x60] sm:$0xff]
    %v249 = vld [vmem:[%s235 + $0x68] sm:$0xff]
    %v250 = vld [vmem:[%s235 + $0x70] sm:$0xff]
    %v251 = vld [vmem:[%s235 + $0x78] sm:$0xff]
    %s252 = scalar_lea.vmem [#allocation8], 4
    %v253 = vld [vmem:[%s252] sm:$0x1]
    %v255 = vperm.slane %v253, 0
    %257 = vmatpush.msra.mxu0 %v251
    %258 = vmatpush.msra.mxu0 %v250
    %259 = vmatpush.msra.mxu0 %v249
    %260 = vmatpush.msra.mxu0 %v248
    %261 = vmatpush.msra.mxu0 %v247
    %262 = vmatpush.msra.mxu0 %v246
    %263 = vmatpush.msra.mxu0 %v245
    %264 = vmatpush.msra.mxu0 %v244
    %265 = vmatpush.msra.mxu0 %v243
    %266 = vmatpush.msra.mxu0 %v242
    %267 = vmatpush.msra.mxu0 %v241
    %268 = vmatpush.msra.mxu0 %v240
    %269 = vmatpush.msra.mxu0 %v239
    %270 = vmatpush.msra.mxu0 %v238
    %271 = vmatpush.msra.mxu0 %v237
    %272 = vmatpush.msra.mxu0 %v236
    %273 = vmatmul.f32.gmra.mxu0 %v234
    %v274 = vpop.f32.mrf.mxu0
    %v275 = vadd.f32 %v255, %v274
    %276 = vdwg.mxu0
    %277 = vst [vmem:[#allocation9] sm:$0xff] %v275
    // Predicated region
    $region26: #{qnetwork_forward.1} parent=1 // pred_check
      _
    $region27: #{qnetwork_forward.1} parent=1 // pred_check_branch
      %279 = sbr.rel (0) target = $region29
    $region28: #{qnetwork_forward.1} parent=1 // pred_region
      %281 = vsyncadd [#allocation5], 0
      %s283 = sshll.u32 [#allocation9], 4
      %s284 = int_to_ptr.vmem [resolvable:$true] %s283
      %s285 = sshll.u32 %s3, 4
      %s286 = int_to_ptr.hbm [resolvable:$true] %s285
      %288 = dma.vmem_to_hbm [thread:$0]  %s284, 128, %s286, [#allocation5]
    $region29: #{qnetwork_forward.1} parent=1 // pred_fallthru
      _
    // Predicated region
    $region30: #{qnetwork_forward.1} parent=1 // pred_check
      _
    $region31: #{qnetwork_forward.1} parent=1 // pred_check_branch
      %290 = sbr.rel (0) target = $region33
    $region32: #{qnetwork_forward.1} parent=1 // pred_region
      %292 = dma.done [#allocation5], 128
    $region33: #{qnetwork_forward.1} parent=1 // pred_fallthru
      _
    %293 = vsyncpa [#allocation4], 1
    %294 = vsyncpa [#allocation7], 1
    %295 = vsyncpa [#allocation5], 1

</llo_original>
